<compile_context>
chip_gen: v5e
topology: v5e:2x2
jax: 0.10.0
libtpu: 0.0.40
codegen_flags: <defaults>
</compile_context>

<pallas_src>
import jax
import jax.numpy as jnp
from jax import lax
from jax.experimental import pallas as pl
from jax.experimental.pallas import tpu as pltpu

_F32 = jnp.float32
_TN2 = 512                      # stage-2 (adjacency) tile; Np is padded to a multiple


# ---------------------------------------------------------------------------
# Device-derived budgets (trace-time constants)
# ---------------------------------------------------------------------------

def _vmem_capacity_bytes():
    try:
        info = pltpu.get_tpu_info()
        cap = getattr(info, "vmem_capacity_bytes", None)
        if cap:
            return int(cap)
    except Exception:
        pass
    return 64 * 1024 * 1024          # conservative fallback (v7x per-core VMEM)


_VMEM_CAP = _vmem_capacity_bytes()
_VMEM_LIMIT = min(int(_VMEM_CAP * 0.85), 110 * 1024 * 1024)   # ~54 MiB on v7x, ~110 on v6e
_DEFAULT_RESIDENT_BUDGET = min(_VMEM_CAP // 4, 48 * 1024 * 1024)
_FUSED_MAX_NP = 1024


# ---------------------------------------------------------------------------
# Kernels
# ---------------------------------------------------------------------------

def _fused_kernel(x_ref, w_ref, b_ref, adj_ref, samp_ref, out_ref):
    """Whole forward in one kernel (small-N path, everything VMEM resident)."""
    lin = jnp.dot(x_ref[...], w_ref[...], preferred_element_type=jnp.float32) + b_ref[...]
    h = jnp.maximum(lin, 0.0)
    att = jnp.exp(-h)
    m = h * att
    adj = adj_ref[...].astype(jnp.float32)          # bf16 storage, f32 MXU path
    mean = jnp.maximum(jnp.dot(adj, m, preferred_element_type=jnp.float32), 0.0)
    var = jnp.maximum(jnp.dot(adj, m * att, preferred_element_type=jnp.float32), 0.0)
    z = mean + samp_ref[...] * jnp.sqrt(var)
    out_ref[...] = lax.dot_general(
        z, z, dimension_numbers=(((1,), (1,)), ((), ())),
        preferred_element_type=jnp.float32)


def _message_kernel(x_ref, w_ref, b_ref, mv_ref):
    """Per node-row block: mv = [h*att | h*att*att], h = relu(x @ W + b) (W pre-transposed)."""
    hp = w_ref.shape[1]
    lin = jnp.dot(x_ref[...], w_ref[...], preferred_element_type=jnp.float32) + b_ref[...]
    h = jnp.maximum(lin, 0.0)
    att = jnp.exp(-h)
    m = h * att
    mv_ref[:, :hp] = m
    mv_ref[:, hp:] = m * att


def _make_aggregate_kernel(mv_resident):
    """acc += adj_blk @ [m | v]; at last k: relu, split, z = mean + samp*sqrt(var)."""
    def kernel(adj_ref, mv_ref, samp_ref, z_ref, acc_ref):
        k = pl.program_id(1)

        @pl.when(k == 0)
        def _init():
            acc_ref[...] = jnp.zeros_like(acc_ref)

        adj_blk = adj_ref[...].astype(jnp.float32)        # bf16 -> f32 on the VPU
        if mv_resident:
            tk = adj_ref.shape[1]
            off = pl.multiple_of(k * tk, tk)
            mv_blk = mv_ref[pl.ds(off, tk), :]            # whole mv lives in VMEM
        else:
            mv_blk = mv_ref[...]                          # streamed (TN2, 2*Hp) block
        # Single fused MXU pass covers both message-passing matmuls.
        acc_ref[...] += jnp.dot(adj_blk, mv_blk, preferred_element_type=jnp.float32)

        @pl.when(k == pl.num_programs(1) - 1)
        def _fin():
            hp = samp_ref.shape[1]
            agg = jnp.maximum(acc_ref[...], 0.0)          # relu(mean), relu(var) in one pass
            z_ref[...] = agg[:, :hp] + samp_ref[...] * jnp.sqrt(agg[:, hp:])
    return kernel


def _make_gram_kernel(z_resident):
    """out[i, j] block of z @ z.T (no in-kernel transpose)."""
    if z_resident:
        def kernel(z_ref, out_ref):
            tr = out_ref.shape[0]
            i0 = pl.multiple_of(pl.program_id(0) * tr, tr)
            j0 = pl.multiple_of(pl.program_id(1) * tr, tr)
            zi = z_ref[pl.ds(i0, tr), :]
            zj = z_ref[pl.ds(j0, tr), :]
            out_ref[...] = lax.dot_general(
                zi, zj, dimension_numbers=(((1,), (1,)), ((), ())),
                preferred_element_type=jnp.float32)
    else:
        def kernel(zi_ref, zj_ref, out_ref):
            out_ref[...] = lax.dot_general(
                zi_ref[...], zj_ref[...], dimension_numbers=(((1,), (1,)), ((), ())),
                preferred_element_type=jnp.float32)
    return kernel


# ---------------------------------------------------------------------------
# Wrapper
# ---------------------------------------------------------------------------

def _round_up(n, m):
    return ((n + m - 1) // m) * m


def _largest_tile(np_, caps):
    for t in caps:
        if np_ % t == 0:
            return t
    return np_


def _forward_impl(x, edge_index, w_mean, b_mean, sample, *,
                  force_tiled=False, resident_budget=None):
    """x: [N, H] f32, edge_index: [2, E] int32, w_mean: [H, H] (torch [out, in] layout),
    b_mean: [H], sample: [N, H].  Returns [N, N] f32 (eval-mode forward)."""
    N, H = x.shape
    Hp = _round_up(H, 128)

    if resident_budget is None:
        resident_budget = _DEFAULT_RESIDENT_BUDGET

    Np_small = _round_up(N, 128)
    use_fused = (not force_tiled) and (Np_small <= _FUSED_MAX_NP) and (Hp <= 512)
    Np = Np_small if use_fused else _round_up(N, _TN2)

    # Node/feature padded inputs (O(N*Hp) -- cheap). Zero padding is semantically inert:
    # padded feature cols give zero messages; padded node rows/cols of adj are zero so
    # padded nodes never contribute; sample padded entries are zero -> z padded = 0.
    x_p = jnp.pad(x.astype(_F32), ((0, Np - N), (0, Hp - H)))
    s_p = jnp.pad(sample.astype(_F32), ((0, Np - N), (0, Hp - H)))
    w_p = jnp.pad(w_mean.astype(_F32).T, ((0, Hp - H), (0, Hp - H)))     # [in, out]
    b_p = jnp.pad(b_mean.astype(_F32).reshape(1, H), ((0, 0), (0, Hp - H)))

    # Dense adjacency built directly at the padded size (no O(N^2) jnp.pad pass),
    # stored bf16 (edge counts are small integers -> exact), cast back in-kernel.
    # Like torch_geometric.to_dense_adj with num_nodes = x.shape[0].
    src, dst = edge_index[0], edge_index[1]
    adj_p = jnp.zeros((Np, Np), _F32).at[src, dst].add(1.0).astype(jnp.bfloat16)

    if use_fused:
        # ---- Small-N fast path: one kernel, no intermediate HBM traffic. ----
        out_pad = pl.pallas_call(
            _fused_kernel,
            out_shape=jax.ShapeDtypeStruct((Np, Np), _F32),
            grid=(1,),
            in_specs=[
                pl.BlockSpec((Np, Hp), lambda i: (0, 0)),   # x
                pl.BlockSpec((Hp, Hp), lambda i: (0, 0)),   # W ([in,out])
                pl.BlockSpec((1, Hp), lambda i: (0, 0)),    # bias
                pl.BlockSpec((Np, Np), lambda i: (0, 0)),   # adj (bf16)
                pl.BlockSpec((Np, Hp), lambda i: (0, 0)),   # sample
            ],
            out_specs=pl.BlockSpec((Np, Np), lambda i: (0, 0)),
            compiler_params=pltpu.CompilerParams(
                dimension_semantics=("arbitrary",),
                vmem_limit_bytes=_VMEM_LIMIT),
        )(x_p, w_p, b_p, adj_p, s_p)
        # The final [:N,:N] slice stays: the public contract is the exact [N,N] output.
        return out_pad[:N, :N]

    # ---- Tiled, software-pipelined path (large N). ----
    n2 = Np // _TN2
    caps1 = (2048, 1024, 512) if Hp <= 256 else ((1024, 512) if Hp <= 1024 else (512,))
    caps3 = (1024, 512) if Hp <= 1024 else (512,)
    TR1 = _largest_tile(Np, caps1)      # stage 1: skinny row blocks -> big tiles
    TR3 = _largest_tile(Np, caps3)      # stage 3: out tile is quadratic -> cap at 1024
    n1, n3 = Np // TR1, Np // TR3

    mv_resident = (Np * 2 * Hp * 4) <= resident_budget
    z_resident = (Np * Hp * 4) <= resident_budget

    # Stage 1: per-node messages mv = [h*att | h*att*att]  -> [Np, 2*Hp]
    mv = pl.pallas_call(
        _message_kernel,
        out_shape=jax.ShapeDtypeStruct((Np, 2 * Hp), _F32),
        grid=(n1,),
        in_specs=[
            pl.BlockSpec((TR1, Hp), lambda i: (i, 0)),   # x row block
            pl.BlockSpec((Hp, Hp), lambda i: (0, 0)),    # W ([in,out], pre-transposed)
            pl.BlockSpec((1, Hp), lambda i: (0, 0)),     # bias
        ],
        out_specs=pl.BlockSpec((TR1, 2 * Hp), lambda i: (i, 0)),
        compiler_params=pltpu.CompilerParams(
            dimension_semantics=("parallel",),
            vmem_limit_bytes=_VMEM_LIMIT),
    )(x_p, w_p, b_p)

    # Stage 2: z = relu(adj @ mv) split into mean/var, reparameterized  -> [Np, Hp]
    # NOTE: on v5e an exposed adj DMA could additionally use pipeline_mode=pl.Buffered(3).
    mv_spec = (pl.BlockSpec(memory_space=pltpu.MemorySpace.VMEM) if mv_resident
               else pl.BlockSpec((_TN2, 2 * Hp), lambda i, k: (k, 0)))
    z = pl.pallas_call(
        _make_aggregate_kernel(mv_resident),
        out_shape=jax.ShapeDtypeStruct((Np, Hp), _F32),
        grid=(n2, n2),                                   # (i rows, k reduction) -- k last
        in_specs=[
            pl.BlockSpec((_TN2, _TN2), lambda i, k: (i, k)),   # adj tile (bf16)
            mv_spec,                                           # mv: resident or streamed
            pl.BlockSpec((_TN2, Hp), lambda i, k: (i, 0)),     # sample tile
        ],
        out_specs=pl.BlockSpec((_TN2, Hp), lambda i, k: (i, 0)),
        scratch_shapes=[pltpu.VMEM((_TN2, 2 * Hp), _F32)],
        compiler_params=pltpu.CompilerParams(
            dimension_semantics=("parallel", "arbitrary"),
            vmem_limit_bytes=_VMEM_LIMIT),
    )(adj_p, mv, s_p)

    # Stage 3: out = z @ z.T
    if z_resident:
        out_pad = pl.pallas_call(
            _make_gram_kernel(True),
            out_shape=jax.ShapeDtypeStruct((Np, Np), _F32),
            grid=(n3, n3),
            in_specs=[pl.BlockSpec(memory_space=pltpu.MemorySpace.VMEM)],  # z read once
            out_specs=pl.BlockSpec((TR3, TR3), lambda i, j: (i, j)),
            compiler_params=pltpu.CompilerParams(
                dimension_semantics=("parallel", "parallel"),
                vmem_limit_bytes=_VMEM_LIMIT),
        )(z)
    else:
        out_pad = pl.pallas_call(
            _make_gram_kernel(False),
            out_shape=jax.ShapeDtypeStruct((Np, Np), _F32),
            grid=(n3, n3),
            in_specs=[
                pl.BlockSpec((TR3, Hp), lambda i, j: (i, 0)),
                pl.BlockSpec((TR3, Hp), lambda i, j: (j, 0)),
            ],
            out_specs=pl.BlockSpec((TR3, TR3), lambda i, j: (i, j)),
            compiler_params=pltpu.CompilerParams(
                dimension_semantics=("parallel", "parallel"),
                vmem_limit_bytes=_VMEM_LIMIT),
        )(z, z)

    return out_pad[:N, :N]


structure_decoder_forward = jax.jit(
    _forward_impl, static_argnames=("force_tiled", "resident_budget"))


# ---------------------------------------------------------------------------
# Reference / test
# ---------------------------------------------------------------------------

def _reference(x, edge_index, w_mean, b_mean, sample):
    N = x.shape[0]
    adj = jnp.zeros((N, N), jnp.float32).at[edge_index[0], edge_index[1]].add(1.0)
    hi = lax.Precision.HIGHEST
    lin = jnp.dot(x, w_mean.T, precision=hi) + b_mean
    h = jnp.maximum(lin, 0.0)
    att = jnp.exp(-h)
    mean = jnp.maximum(jnp.dot(adj, h * att, precision=hi), 0.0)
    var = jnp.maximum(jnp.dot(adj, h * att * att, precision=hi), 0.0)
    z = mean + sample * jnp.sqrt(var)
    return jnp.dot(z, z.T, precision=hi)


if __name__ == "__main__":
    root = jax.random.PRNGKey(0)

    def run_case(key, N, H, edge_index, **kw):
        k_x, k_w, k_b, k_s = jax.random.split(key, 4)
        x = jax.random.normal(k_x, (N, H), dtype=jnp.float32)
        bound = 1.0 / (H ** 0.5)   # nn.Linear(nhid, nhid)-style init, deterministic
        w_mean = jax.random.uniform(k_w, (H, H), jnp.float32, -bound, bound)
        b_mean = jax.random.uniform(k_b, (H,), jnp.float32, -bound, bound)
        sample = jax.random.normal(k_s, (N, H), dtype=jnp.float32)  # torch.randn equiv

        out = jax.block_until_ready(
            structure_decoder_forward(x, edge_index, w_mean, b_mean, sample, **kw))
        ref = _reference(x, edge_index, w_mean, b_mean, sample)
        assert out.shape == (N, N)
        err = float(jnp.max(jnp.abs(out - ref)))
        assert jnp.allclose(out, ref, atol=5e-4, rtol=5e-4), err

    def ring_edges(N, offsets):
        nodes = jnp.arange(N, dtype=jnp.int32)
        src = jnp.concatenate([nodes for _ in offsets])
        dst = jnp.concatenate([(nodes + o) % N for o in offsets])
        return jnp.stack([src, dst])

    # Case 1: module's natural small shape (8 nodes, nhid=32) -> fused single-kernel path.
    src = jnp.array([0, 1, 2, 3, 4, 5, 6, 7, 0, 2, 4, 6], dtype=jnp.int32)
    dst = jnp.array([1, 2, 3, 4, 5, 6, 7, 0, 4, 6, 0, 2], dtype=jnp.int32)
    run_case(jax.random.fold_in(root, 1), 8, 32, jnp.stack([src, dst]))

    # Case 2: tiled path with VMEM-resident mv / z (Np=1024 -> multi-block stage 2).
    run_case(jax.random.fold_in(root, 2), 700, 48, ring_edges(700, (1, 7, 31)),
             force_tiled=True)

    # Case 3: tiled path with blocked/streamed mv / z fallback (Np=1536 -> 3x3 grids).
    run_case(jax.random.fold_in(root, 3), 1100, 48, ring_edges(1100, (1, 5)),
             force_tiled=True, resident_budget=0)

    print("KERNEL_OK")
</pallas_src>

<mosaic_0001>
module attributes {stable_mosaic.version = 11 : i64} {
  func.func @_fused_kernel(%arg0: i32, %arg1: memref<128x128xf32, #tpu.memory_space<vmem>>, %arg2: memref<128x128xf32, #tpu.memory_space<vmem>>, %arg3: memref<1x128xf32, #tpu.memory_space<vmem>>, %arg4: memref<128x128xbf16, #tpu.memory_space<vmem>>, %arg5: memref<128x128xf32, #tpu.memory_space<vmem>>, %arg6: memref<128x128xf32, #tpu.memory_space<vmem>>) attributes {dimension_semantics = [#tpu.dimension_semantics<arbitrary>], iteration_bounds = array<i64: 1>, scalar_prefetch = 0 : i64, scratch_operands = 0 : i64, tpu.core_type = #tpu.core_type<tc>, window_params = [{pipeline_mode = #tpu.pipeline_mode<synchronous>, transform_indices = @transform_0, window_bounds = array<i64: 128, 128>}, {pipeline_mode = #tpu.pipeline_mode<synchronous>, transform_indices = @transform_1, window_bounds = array<i64: 128, 128>}, {pipeline_mode = #tpu.pipeline_mode<synchronous>, transform_indices = @transform_2, window_bounds = array<i64: 1, 128>}, {pipeline_mode = #tpu.pipeline_mode<synchronous>, transform_indices = @transform_3, window_bounds = array<i64: 128, 128>}, {pipeline_mode = #tpu.pipeline_mode<synchronous>, transform_indices = @transform_4, window_bounds = array<i64: 128, 128>}, {pipeline_mode = #tpu.pipeline_mode<synchronous>, transform_indices = @transform_5, window_bounds = array<i64: 128, 128>}]} {
    %c0 = arith.constant 0 : index
    %c0_0 = arith.constant 0 : index
    %0 = vector.load %arg1[%c0, %c0_0] : memref<128x128xf32, #tpu.memory_space<vmem>>, vector<128x128xf32>
    %c0_1 = arith.constant 0 : index
    %c0_2 = arith.constant 0 : index
    %1 = vector.load %arg2[%c0_1, %c0_2] : memref<128x128xf32, #tpu.memory_space<vmem>>, vector<128x128xf32>
    %cst = arith.constant dense<0.000000e+00> : vector<128x128xf32>
    %2 = tpu.matmul %0, %1, %cst {dimension_numbers = #tpu.dot_dimension_numbers<[1], [0], [0], [1], [0, 0, 1, 1], [], []>} : vector<128x128xf32>, vector<128x128xf32>, vector<128x128xf32> -> vector<128x128xf32>
    %c0_3 = arith.constant 0 : index
    %c0_4 = arith.constant 0 : index
    %3 = vector.load %arg3[%c0_3, %c0_4] : memref<1x128xf32, #tpu.memory_space<vmem>>, vector<1x128xf32>
    %4 = vector.broadcast %3 : vector<1x128xf32> to vector<128x128xf32>
    %5 = arith.addf %2, %4 : vector<128x128xf32>
    %cst_5 = arith.constant 0.000000e+00 : f32
    %6 = vector.broadcast %cst_5 : f32 to vector<128x128xf32>
    %7 = arith.maximumf %5, %6 : vector<128x128xf32>
    %cst_6 = arith.constant 0.000000e+00 : f32
    %8 = vector.broadcast %cst_6 : f32 to vector<128x128xf32>
    %9 = arith.subf %8, %7 : vector<128x128xf32>
    %10 = math.exp %9 : vector<128x128xf32>
    %11 = arith.mulf %7, %10 : vector<128x128xf32>
    %c0_7 = arith.constant 0 : index
    %c0_8 = arith.constant 0 : index
    %12 = vector.load %arg4[%c0_7, %c0_8] : memref<128x128xbf16, #tpu.memory_space<vmem>>, vector<128x128xbf16>
    %13 = arith.extf %12 : vector<128x128xbf16> to vector<128x128xf32>
    %cst_9 = arith.constant dense<0.000000e+00> : vector<128x128xf32>
    %14 = tpu.matmul %13, %11, %cst_9 {dimension_numbers = #tpu.dot_dimension_numbers<[1], [0], [0], [1], [0, 0, 1, 1], [], []>} : vector<128x128xf32>, vector<128x128xf32>, vector<128x128xf32> -> vector<128x128xf32>
    %cst_10 = arith.constant 0.000000e+00 : f32
    %15 = vector.broadcast %cst_10 : f32 to vector<128x128xf32>
    %16 = arith.maximumf %14, %15 : vector<128x128xf32>
    %17 = arith.mulf %11, %10 : vector<128x128xf32>
    %cst_11 = arith.constant dense<0.000000e+00> : vector<128x128xf32>
    %18 = tpu.matmul %13, %17, %cst_11 {dimension_numbers = #tpu.dot_dimension_numbers<[1], [0], [0], [1], [0, 0, 1, 1], [], []>} : vector<128x128xf32>, vector<128x128xf32>, vector<128x128xf32> -> vector<128x128xf32>
    %cst_12 = arith.constant 0.000000e+00 : f32
    %19 = vector.broadcast %cst_12 : f32 to vector<128x128xf32>
    %20 = arith.maximumf %18, %19 : vector<128x128xf32>
    %c0_13 = arith.constant 0 : index
    %c0_14 = arith.constant 0 : index
    %21 = vector.load %arg5[%c0_13, %c0_14] : memref<128x128xf32, #tpu.memory_space<vmem>>, vector<128x128xf32>
    %22 = math.sqrt %20 : vector<128x128xf32>
    %23 = arith.mulf %21, %22 : vector<128x128xf32>
    %24 = arith.addf %16, %23 : vector<128x128xf32>
    %cst_15 = arith.constant dense<0.000000e+00> : vector<128x128xf32>
    %25 = tpu.matmul %24, %24, %cst_15 {dimension_numbers = #tpu.dot_dimension_numbers<[1], [1], [0], [0], [0, 0, 1, 0], [], []>} : vector<128x128xf32>, vector<128x128xf32>, vector<128x128xf32> -> vector<128x128xf32>
    %c0_16 = arith.constant 0 : index
    %c0_17 = arith.constant 0 : index
    %26 = vector.load %arg6[%c0_16, %c0_17] : memref<128x128xf32, #tpu.memory_space<vmem>>, vector<128x128xf32>
    tpu.vector_store %arg6[%c0_16, %c0_17], %25 {strides = array<i32>} : memref<128x128xf32, #tpu.memory_space<vmem>>, vector<128x128xf32>,
    return
  }
  func.func @transform_0(%arg0: i32) -> (i32, i32) {
    %c0_i32 = arith.constant 0 : i32
    %c0_i32_0 = arith.constant 0 : i32
    %c0_i32_1 = arith.constant 0 : i32
    return %c0_i32, %c0_i32_0 : i32, i32
  }
  func.func @transform_1(%arg0: i32) -> (i32, i32) {
    %c0_i32 = arith.constant 0 : i32
    %c0_i32_0 = arith.constant 0 : i32
    %c0_i32_1 = arith.constant 0 : i32
    return %c0_i32, %c0_i32_0 : i32, i32
  }
  func.func @transform_2(%arg0: i32) -> (i32, i32) {
    %c0_i32 = arith.constant 0 : i32
    %c0_i32_0 = arith.constant 0 : i32
    %c0_i32_1 = arith.constant 0 : i32
    return %c0_i32, %c0_i32_0 : i32, i32
  }
  func.func @transform_3(%arg0: i32) -> (i32, i32) {
    %c0_i32 = arith.constant 0 : i32
    %c0_i32_0 = arith.constant 0 : i32
    %c0_i32_1 = arith.constant 0 : i32
    return %c0_i32, %c0_i32_0 : i32, i32
  }
  func.func @transform_4(%arg0: i32) -> (i32, i32) {
    %c0_i32 = arith.constant 0 : i32
    %c0_i32_0 = arith.constant 0 : i32
    %c0_i32_1 = arith.constant 0 : i32
    return %c0_i32, %c0_i32_0 : i32, i32
  }
  func.func @transform_5(%arg0: i32) -> (i32, i32) {
    %c0_i32 = arith.constant 0 : i32
    %c0_i32_0 = arith.constant 0 : i32
    %c0_i32_1 = arith.constant 0 : i32
    return %c0_i32, %c0_i32_0 : i32, i32
  }
}

</mosaic_0001>

<llo_original>
// kernel: _forward_impl.1
$region0: #{_forward_impl.1}
  #allocation0 [shape = 'u32[]', space=smem, size = 0x4, offset = 0x4, fixed_abs, tag = 'smem constant byte address 0x4 - core index']
  #allocation1 [shape = 'u32[72,128]{1,0:T(1,128)}', space=vmem, size = 0x9000, scoped, tag = 'internal scratch']
  %s0 = inlined_call_operand.vmem [shape: f32[128,128], index: 0, kind: input, shape index: {}]
  %s1 = inlined_call_operand.vmem [shape: f32[128,128], index: 1, kind: input, shape index: {}]
  %s2 = inlined_call_operand.vmem [shape: f32[1,128], index: 2, kind: input, shape index: {}]
  %s3 = inlined_call_operand.vmem [shape: bf16[128,128], index: 3, kind: input, shape index: {}]
  %s4 = inlined_call_operand.vmem [shape: f32[128,128], index: 4, kind: input, shape index: {}]
  %s5 = inlined_call_operand.vmem [shape: f32[128,128], index: 5, kind: output, shape index: {}]
  %s6 = sld [smem:[#allocation0]]
  $region30: #{_forward_impl.1} parent=0
    _
  %s8 = ssub.s32 1, %s6
  %s9 = scalar_select 0, %s8, %s6
  // Predicated region
  $region2: #{_forward_impl.1} parent=0 // pred_check
    _
  $region3: #{_forward_impl.1} parent=0 // pred_check_branch
    %11 = sbr.rel (0) target = $region5
  $region4: #{_forward_impl.1} parent=0 // pred_region
    _
  $region5: #{_forward_impl.1} parent=0 // pred_fallthru
    _
  // Predicated region
  $region6: #{_forward_impl.1} parent=0 // pred_check
    _
  $region7: #{_forward_impl.1} parent=0 // pred_check_branch
    %13 = sbr.rel (0) target = $region9
  $region8: #{_forward_impl.1} parent=0 // pred_region
    _
  $region9: #{_forward_impl.1} parent=0 // pred_fallthru
    _
  // Predicated region
  $region10: #{_forward_impl.1} parent=0 // pred_check
    _
  $region11: #{_forward_impl.1} parent=0 // pred_check_branch
    %15 = sbr.rel (0) target = $region13
  $region12: #{_forward_impl.1} parent=0 // pred_region
    _
  $region13: #{_forward_impl.1} parent=0 // pred_fallthru
    _
  // Predicated region
  $region14: #{_forward_impl.1} parent=0 // pred_check
    _
  $region15: #{_forward_impl.1} parent=0 // pred_check_branch
    %17 = sbr.rel (0) target = $region17
  $region16: #{_forward_impl.1} parent=0 // pred_region
    _
  $region17: #{_forward_impl.1} parent=0 // pred_fallthru
    _
  // Predicated region
  $region18: #{_forward_impl.1} parent=0 // pred_check
    _
  $region19: #{_forward_impl.1} parent=0 // pred_check_branch
    %19 = sbr.rel (0) target = $region21
  $region20: #{_forward_impl.1} parent=0 // pred_region
    _
  $region21: #{_forward_impl.1} parent=0 // pred_fallthru
    _
  %v20 = vld [vmem:[%s0] sm:$0xff]
  %v21 = vld [vmem:[%s0 + $0x8] sm:$0xff]
  %v22 = vld [vmem:[%s0 + $0x10] sm:$0xff]
  %v23 = vld [vmem:[%s0 + $0x18] sm:$0xff]
  %v24 = vld [vmem:[%s0 + $0x20] sm:$0xff]
  %v25 = vld [vmem:[%s0 + $0x28] sm:$0xff]
  %v26 = vld [vmem:[%s0 + $0x30] sm:$0xff]
  %v27 = vld [vmem:[%s0 + $0x38] sm:$0xff]
  %v28 = vld [vmem:[%s0 + $0x40] sm:$0xff]
  %v29 = vld [vmem:[%s0 + $0x48] sm:$0xff]
  %v30 = vld [vmem:[%s0 + $0x50] sm:$0xff]
  %v31 = vld [vmem:[%s0 + $0x58] sm:$0xff]
  %v32 = vld [vmem:[%s0 + $0x60] sm:$0xff]
  %v33 = vld [vmem:[%s0 + $0x68] sm:$0xff]
  %v34 = vld [vmem:[%s0 + $0x70] sm:$0xff]
  %v35 = vld [vmem:[%s0 + $0x78] sm:$0xff]
  %v36 = vld [vmem:[%s1] sm:$0xff]
  %v37 = vld [vmem:[%s1 + $0x8] sm:$0xff]
  %v38 = vld [vmem:[%s1 + $0x10] sm:$0xff]
  %v39 = vld [vmem:[%s1 + $0x18] sm:$0xff]
  %v40 = vld [vmem:[%s1 + $0x20] sm:$0xff]
  %v41 = vld [vmem:[%s1 + $0x28] sm:$0xff]
  %v42 = vld [vmem:[%s1 + $0x30] sm:$0xff]
  %v43 = vld [vmem:[%s1 + $0x38] sm:$0xff]
  %v44 = vld [vmem:[%s1 + $0x40] sm:$0xff]
  %v45 = vld [vmem:[%s1 + $0x48] sm:$0xff]
  %v46 = vld [vmem:[%s1 + $0x50] sm:$0xff]
  %v47 = vld [vmem:[%s1 + $0x58] sm:$0xff]
  %v48 = vld [vmem:[%s1 + $0x60] sm:$0xff]
  %v49 = vld [vmem:[%s1 + $0x68] sm:$0xff]
  %v50 = vld [vmem:[%s1 + $0x70] sm:$0xff]
  %v51 = vld [vmem:[%s1 + $0x78] sm:$0xff]
  %v52 = vld [vmem:[%s2] sm:$0x1]
  %v54 = vperm.slane %v52, 0
  %56 = vmatpush.msra.mxu0 %v51
  %57 = vmatpush.msra.mxu0 %v50
  %58 = vmatpush.msra.mxu0 %v49
  %59 = vmatpush.msra.mxu0 %v48
  %60 = vmatpush.msra.mxu0 %v47
  %61 = vmatpush.msra.mxu0 %v46
  %62 = vmatpush.msra.mxu0 %v45
  %63 = vmatpush.msra.mxu0 %v44
  %64 = vmatpush.msra.mxu0 %v43
  %65 = vmatpush.msra.mxu0 %v42
  %66 = vmatpush.msra.mxu0 %v41
  %67 = vmatpush.msra.mxu0 %v40
  %68 = vmatpush.msra.mxu0 %v39
  %69 = vmatpush.msra.mxu0 %v38
  %70 = vmatpush.msra.mxu0 %v37
  %71 = vmatpush.msra.mxu0 %v36
  %72 = vmatmul.f32.gmra.mxu0 %v20
  %v73 = vpop.f32.mrf.mxu0
  %v74 = vadd.f32 %v54, %v73
  %75 = vmatmul.f32.gmra.mxu0 %v21
  %v76 = vpop.f32.mrf.mxu0
  %v77 = vadd.f32 %v54, %v76
  %78 = vmatmul.f32.gmra.mxu0 %v22
  %v79 = vpop.f32.mrf.mxu0
  %v80 = vadd.f32 %v54, %v79
  %81 = vmatmul.f32.gmra.mxu0 %v23
  %v82 = vpop.f32.mrf.mxu0
  %v83 = vadd.f32 %v54, %v82
  %84 = vmatmul.f32.gmra.mxu0 %v24
  %v85 = vpop.f32.mrf.mxu0
  %v86 = vadd.f32 %v54, %v85
  %87 = vmatmul.f32.gmra.mxu0 %v25
  %v88 = vpop.f32.mrf.mxu0
  %v89 = vadd.f32 %v54, %v88
  %90 = vmatmul.f32.gmra.mxu0 %v26
  %v91 = vpop.f32.mrf.mxu0
  %v92 = vadd.f32 %v54, %v91
  %93 = vmatmul.f32.gmra.mxu0 %v27
  %v94 = vpop.f32.mrf.mxu0
  %v95 = vadd.f32 %v54, %v94
  %96 = vmatmul.f32.gmra.mxu0 %v28
  %v97 = vpop.f32.mrf.mxu0
  %v98 = vadd.f32 %v54, %v97
  %99 = vmatmul.f32.gmra.mxu0 %v29
  %v100 = vpop.f32.mrf.mxu0
  %v101 = vadd.f32 %v54, %v100
  %102 = vmatmul.f32.gmra.mxu0 %v30
  %v103 = vpop.f32.mrf.mxu0
  %v104 = vadd.f32 %v54, %v103
  %105 = vmatmul.f32.gmra.mxu0 %v31
  %v106 = vpop.f32.mrf.mxu0
  %v107 = vadd.f32 %v54, %v106
  %108 = vmatmul.f32.gmra.mxu0 %v32
  %v109 = vpop.f32.mrf.mxu0
  %v110 = vadd.f32 %v54, %v109
  %111 = vmatmul.f32.gmra.mxu0 %v33
  %v112 = vpop.f32.mrf.mxu0
  %v113 = vadd.f32 %v54, %v112
  %114 = vmatmul.f32.gmra.mxu0 %v34
  %v115 = vpop.f32.mrf.mxu0
  %v116 = vadd.f32 %v54, %v115
  %117 = vmatmul.f32.gmra.mxu0 %v35
  %v118 = vpop.f32.mrf.mxu0
  %v119 = vadd.f32 %v54, %v118
  %120 = vdwg.mxu0
  %v121 = vmax.f32 %v74, 0.0
  %v122 = vmax.f32 %v77, 0.0
  %v123 = vmax.f32 %v80, 0.0
  %v124 = vmax.f32 %v83, 0.0
  %v125 = vmax.f32 %v86, 0.0
  %v126 = vmax.f32 %v89, 0.0
  %v127 = vmax.f32 %v92, 0.0
  %v128 = vmax.f32 %v95, 0.0
  %v129 = vmax.f32 %v98, 0.0
  %v130 = vmax.f32 %v101, 0.0
  %v131 = vmax.f32 %v104, 0.0
  %v132 = vmax.f32 %v107, 0.0
  %v133 = vmax.f32 %v110, 0.0
  %v134 = vmax.f32 %v113, 0.0
  %v135 = vmax.f32 %v116, 0.0
  %v136 = vmax.f32 %v119, 0.0
  %v137 = vsub.f32 0.0, %v121
  %v138 = vsub.f32 0.0, %v122
  %v139 = vsub.f32 0.0, %v123
  %v140 = vsub.f32 0.0, %v124
  %v141 = vsub.f32 0.0, %v125
  %v142 = vsub.f32 0.0, %v126
  %v143 = vsub.f32 0.0, %v127
  %v144 = vsub.f32 0.0, %v128
  %v145 = vsub.f32 0.0, %v129
  %v146 = vsub.f32 0.0, %v130
  %v147 = vsub.f32 0.0, %v131
  %v148 = vsub.f32 0.0, %v132
  %v149 = vsub.f32 0.0, %v133
  %v150 = vsub.f32 0.0, %v134
  %v151 = vsub.f32 0.0, %v135
  %v152 = vsub.f32 0.0, %v136
  %v153 = vmul.f32 %v137, 1.442695
  %v154 = vpow.pop %v153
  %v155 = vmul.f32 %v138, 1.442695
  %v156 = vpow.pop %v155
  %v157 = vmul.f32 %v139, 1.442695
  %v158 = vpow.pop %v157
  %v159 = vmul.f32 %v140, 1.442695
  %v160 = vpow.pop %v159
  %v161 = vmul.f32 %v141, 1.442695
  %v162 = vpow.pop %v161
  %v163 = vmul.f32 %v142, 1.442695
  %v164 = vpow.pop %v163
  %v165 = vmul.f32 %v143, 1.442695
  %v166 = vpow.pop %v165
  %v167 = vmul.f32 %v144, 1.442695
  %v168 = vpow.pop %v167
  %v169 = vmul.f32 %v145, 1.442695
  %v170 = vpow.pop %v169
  %v171 = vmul.f32 %v146, 1.442695
  %v172 = vpow.pop %v171
  %v173 = vmul.f32 %v147, 1.442695
  %v174 = vpow.pop %v173
  %v175 = vmul.f32 %v148, 1.442695
  %v176 = vpow.pop %v175
  %v177 = vmul.f32 %v149, 1.442695
  %v178 = vpow.pop %v177
  %v179 = vmul.f32 %v150, 1.442695
  %v180 = vpow.pop %v179
  %v181 = vmul.f32 %v151, 1.442695
  %v182 = vpow.pop %v181
  %v183 = vmul.f32 %v152, 1.442695
  %v184 = vpow.pop %v183
  %v185 = vmul.f32 %v121, %v154
  %v186 = vmul.f32 %v122, %v156
  %v187 = vmul.f32 %v123, %v158
  %v188 = vmul.f32 %v124, %v160
  %v189 = vmul.f32 %v125, %v162
  %v190 = vmul.f32 %v126, %v164
  %v191 = vmul.f32 %v127, %v166
  %v192 = vmul.f32 %v128, %v168
  %v193 = vmul.f32 %v129, %v170
  %v194 = vmul.f32 %v130, %v172
  %v195 = vmul.f32 %v131, %v174
  %v196 = vmul.f32 %v132, %v176
  %v197 = vmul.f32 %v133, %v178
  %v198 = vmul.f32 %v134, %v180
  %v199 = vmul.f32 %v135, %v182
  %v200 = vmul.f32 %v136, %v184
  %v201 = vld [vmem:[%s3] sm:$0xf]
  %v202 = vld [vmem:[%s3 + $0x4] sm:$0xf]
  %v203 = vld [vmem:[%s3 + $0x8] sm:$0xf]
  %v204 = vld [vmem:[%s3 + $0xc] sm:$0xf]
  %v205 = vld [vmem:[%s3 + $0x10] sm:$0xf]
  %v206 = vld [vmem:[%s3 + $0x14] sm:$0xf]
  %v207 = vld [vmem:[%s3 + $0x18] sm:$0xf]
  %v208 = vld [vmem:[%s3 + $0x1c] sm:$0xf]
  %v209 = vld [vmem:[%s3 + $0x20] sm:$0xf]
  %v210 = vld [vmem:[%s3 + $0x24] sm:$0xf]
  %v211 = vld [vmem:[%s3 + $0x28] sm:$0xf]
  %v212 = vld [vmem:[%s3 + $0x2c] sm:$0xf]
  %v213 = vld [vmem:[%s3 + $0x30] sm:$0xf]
  %v214 = vld [vmem:[%s3 + $0x34] sm:$0xf]
  %v215 = vld [vmem:[%s3 + $0x38] sm:$0xf]
  %v216 = vld [vmem:[%s3 + $0x3c] sm:$0xf]
  %v217 = vunpack.c.l.bf16 %v201
  %v218 = vunpack.c.l.bf16 %v202
  %v219 = vunpack.c.l.bf16 %v203
  %v220 = vunpack.c.l.bf16 %v204
  %v221 = vunpack.c.l.bf16 %v205
  %v222 = vunpack.c.l.bf16 %v206
  %v223 = vunpack.c.l.bf16 %v207
  %v224 = vunpack.c.l.bf16 %v208
  %v225 = vunpack.c.l.bf16 %v209
  %v226 = vunpack.c.l.bf16 %v210
  %v227 = vunpack.c.l.bf16 %v211
  %v228 = vunpack.c.l.bf16 %v212
  %v229 = vunpack.c.l.bf16 %v213
  %v230 = vunpack.c.l.bf16 %v214
  %v231 = vunpack.c.l.bf16 %v215
  %v232 = vunpack.c.l.bf16 %v216
  %233 = vmatpush.msra.mxu0 %v200
  %234 = vmatpush.msra.mxu0 %v199
  %235 = vmatpush.msra.mxu0 %v198
  %236 = vmatpush.msra.mxu0 %v197
  %237 = vmatpush.msra.mxu0 %v196
  %238 = vmatpush.msra.mxu0 %v195
  %239 = vmatpush.msra.mxu0 %v194
  %240 = vmatpush.msra.mxu0 %v193
  %241 = vmatpush.msra.mxu0 %v192
  %242 = vmatpush.msra.mxu0 %v191
  %243 = vmatpush.msra.mxu0 %v190
  %244 = vmatpush.msra.mxu0 %v189
  %245 = vmatpush.msra.mxu0 %v188
  %246 = vmatpush.msra.mxu0 %v187
  %247 = vmatpush.msra.mxu0 %v186
  %248 = vmatpush.msra.mxu0 %v185
  %249 = vmatmul.f32.gmra.mxu0 %v217
  %v250 = vpop.f32.mrf.mxu0
  %v251 = vadd.f32 0.0, %v250
  %252 = vmatmul.f32.gmra.mxu0 %v218
  %v253 = vpop.f32.mrf.mxu0
  %v254 = vadd.f32 0.0, %v253
  %255 = vmatmul.f32.gmra.mxu0 %v219
  %v256 = vpop.f32.mrf.mxu0
  %v257 = vadd.f32 0.0, %v256
  %258 = vmatmul.f32.gmra.mxu0 %v220
  %v259 = vpop.f32.mrf.mxu0
  %v260 = vadd.f32 0.0, %v259
  %261 = vmatmul.f32.gmra.mxu0 %v221
  %v262 = vpop.f32.mrf.mxu0
  %v263 = vadd.f32 0.0, %v262
  %264 = vmatmul.f32.gmra.mxu0 %v222
  %v265 = vpop.f32.mrf.mxu0
  %v266 = vadd.f32 0.0, %v265
  %267 = vmatmul.f32.gmra.mxu0 %v223
  %v268 = vpop.f32.mrf.mxu0
  %v269 = vadd.f32 0.0, %v268
  %270 = vmatmul.f32.gmra.mxu0 %v224
  %v271 = vpop.f32.mrf.mxu0
  %v272 = vadd.f32 0.0, %v271
  %273 = vmatmul.f32.gmra.mxu0 %v225
  %v274 = vpop.f32.mrf.mxu0
  %v275 = vadd.f32 0.0, %v274
  %276 = vmatmul.f32.gmra.mxu0 %v226
  %v277 = vpop.f32.mrf.mxu0
  %v278 = vadd.f32 0.0, %v277
  %279 = vmatmul.f32.gmra.mxu0 %v227
  %v280 = vpop.f32.mrf.mxu0
  %v281 = vadd.f32 0.0, %v280
  %282 = vmatmul.f32.gmra.mxu0 %v228
  %v283 = vpop.f32.mrf.mxu0
  %v284 = vadd.f32 0.0, %v283
  %285 = vmatmul.f32.gmra.mxu0 %v229
  %v286 = vpop.f32.mrf.mxu0
  %v287 = vadd.f32 0.0, %v286
  %288 = vmatmul.f32.gmra.mxu0 %v230
  %v289 = vpop.f32.mrf.mxu0
  %v290 = vadd.f32 0.0, %v289
  %291 = vmatmul.f32.gmra.mxu0 %v231
  %v292 = vpop.f32.mrf.mxu0
  %v293 = vadd.f32 0.0, %v292
  %294 = vmatmul.f32.gmra.mxu0 %v232
  %v295 = vpop.f32.mrf.mxu0
  %v296 = vadd.f32 0.0, %v295
  %297 = vdwg.mxu0
  %v298 = vmax.f32 %v251, 0.0
  %v299 = vmax.f32 %v254, 0.0
  %v300 = vmax.f32 %v257, 0.0
  %v301 = vmax.f32 %v260, 0.0
  %v302 = vmax.f32 %v263, 0.0
  %v303 = vmax.f32 %v266, 0.0
  %v304 = vmax.f32 %v269, 0.0
  %v305 = vmax.f32 %v272, 0.0
  %v306 = vmax.f32 %v275, 0.0
  %v307 = vmax.f32 %v278, 0.0
  %v308 = vmax.f32 %v281, 0.0
  %v309 = vmax.f32 %v284, 0.0
  %v310 = vmax.f32 %v287, 0.0
  %v311 = vmax.f32 %v290, 0.0
  %v312 = vmax.f32 %v293, 0.0
  %v313 = vmax.f32 %v296, 0.0
  %v314 = vmul.f32 %v185, %v154
  %v315 = vmul.f32 %v186, %v156
  %v316 = vmul.f32 %v187, %v158
  %v317 = vmul.f32 %v188, %v160
  %v318 = vmul.f32 %v189, %v162
  %v319 = vmul.f32 %v190, %v164
  %v320 = vmul.f32 %v191, %v166
  %v321 = vmul.f32 %v192, %v168
  %v322 = vmul.f32 %v193, %v170
  %v323 = vmul.f32 %v194, %v172
  %v324 = vmul.f32 %v195, %v174
  %v325 = vmul.f32 %v196, %v176
  %v326 = vmul.f32 %v197, %v178
  %v327 = vmul.f32 %v198, %v180
  %v328 = vmul.f32 %v199, %v182
  %v329 = vmul.f32 %v200, %v184
  %330 = vmatpush.msra.mxu0 %v329
  %331 = vmatpush.msra.mxu0 %v328
  %332 = vmatpush.msra.mxu0 %v327
  %333 = vmatpush.msra.mxu0 %v326
  %334 = vmatpush.msra.mxu0 %v325
  %335 = vmatpush.msra.mxu0 %v324
  %336 = vmatpush.msra.mxu0 %v323
  %337 = vmatpush.msra.mxu0 %v322
  %338 = vmatpush.msra.mxu0 %v321
  %339 = vmatpush.msra.mxu0 %v320
  %340 = vmatpush.msra.mxu0 %v319
  %341 = vmatpush.msra.mxu0 %v318
  %342 = vmatpush.msra.mxu0 %v317
  %343 = vmatpush.msra.mxu0 %v316
  %344 = vmatpush.msra.mxu0 %v315
  %345 = vmatpush.msra.mxu0 %v314
  %346 = vmatmul.f32.gmra.mxu0 %v217
  %v347 = vpop.f32.mrf.mxu0
  %v348 = vadd.f32 0.0, %v347
  %349 = vmatmul.f32.gmra.mxu0 %v218
  %v350 = vpop.f32.mrf.mxu0
  %v351 = vadd.f32 0.0, %v350
  %352 = vmatmul.f32.gmra.mxu0 %v219
  %v353 = vpop.f32.mrf.mxu0
  %v354 = vadd.f32 0.0, %v353
  %355 = vmatmul.f32.gmra.mxu0 %v220
  %v356 = vpop.f32.mrf.mxu0
  %v357 = vadd.f32 0.0, %v356
  %358 = vmatmul.f32.gmra.mxu0 %v221
  %v359 = vpop.f32.mrf.mxu0
  %v360 = vadd.f32 0.0, %v359
  %361 = vmatmul.f32.gmra.mxu0 %v222
  %v362 = vpop.f32.mrf.mxu0
  %v363 = vadd.f32 0.0, %v362
  %364 = vmatmul.f32.gmra.mxu0 %v223
  %v365 = vpop.f32.mrf.mxu0
  %v366 = vadd.f32 0.0, %v365
  %367 = vmatmul.f32.gmra.mxu0 %v224
  %v368 = vpop.f32.mrf.mxu0
  %v369 = vadd.f32 0.0, %v368
  %370 = vmatmul.f32.gmra.mxu0 %v225
  %v371 = vpop.f32.mrf.mxu0
  %v372 = vadd.f32 0.0, %v371
  %373 = vmatmul.f32.gmra.mxu0 %v226
  %v374 = vpop.f32.mrf.mxu0
  %v375 = vadd.f32 0.0, %v374
  %376 = vmatmul.f32.gmra.mxu0 %v227
  %v377 = vpop.f32.mrf.mxu0
  %v378 = vadd.f32 0.0, %v377
  %379 = vmatmul.f32.gmra.mxu0 %v228
  %v380 = vpop.f32.mrf.mxu0
  %v381 = vadd.f32 0.0, %v380
  %382 = vmatmul.f32.gmra.mxu0 %v229
  %v383 = vpop.f32.mrf.mxu0
  %v384 = vadd.f32 0.0, %v383
  %385 = vmatmul.f32.gmra.mxu0 %v230
  %v386 = vpop.f32.mrf.mxu0
  %v387 = vadd.f32 0.0, %v386
  %388 = vmatmul.f32.gmra.mxu0 %v231
  %v389 = vpop.f32.mrf.mxu0
  %v390 = vadd.f32 0.0, %v389
  %391 = vmatmul.f32.gmra.mxu0 %v232
  %v392 = vpop.f32.mrf.mxu0
  %v393 = vadd.f32 0.0, %v392
  %394 = vdwg.mxu0
  %v395 = vmax.f32 %v348, 0.0
  %v396 = vmax.f32 %v351, 0.0
  %v397 = vmax.f32 %v354, 0.0
  %v398 = vmax.f32 %v357, 0.0
  %v399 = vmax.f32 %v360, 0.0
  %v400 = vmax.f32 %v363, 0.0
  %v401 = vmax.f32 %v366, 0.0
  %v402 = vmax.f32 %v369, 0.0
  %v403 = vmax.f32 %v372, 0.0
  %v404 = vmax.f32 %v375, 0.0
  %v405 = vmax.f32 %v378, 0.0
  %v406 = vmax.f32 %v381, 0.0
  %v407 = vmax.f32 %v384, 0.0
  %v408 = vmax.f32 %v387, 0.0
  %v409 = vmax.f32 %v390, 0.0
  %v410 = vmax.f32 %v393, 0.0
  %v411 = vld [vmem:[%s4] sm:$0xff]
  %v412 = vld [vmem:[%s4 + $0x8] sm:$0xff]
  %v413 = vld [vmem:[%s4 + $0x10] sm:$0xff]
  %v414 = vld [vmem:[%s4 + $0x18] sm:$0xff]
  %v415 = vld [vmem:[%s4 + $0x20] sm:$0xff]
  %v416 = vld [vmem:[%s4 + $0x28] sm:$0xff]
  %v417 = vld [vmem:[%s4 + $0x30] sm:$0xff]
  %v418 = vld [vmem:[%s4 + $0x38] sm:$0xff]
  %v419 = vld [vmem:[%s4 + $0x40] sm:$0xff]
  %v420 = vld [vmem:[%s4 + $0x48] sm:$0xff]
  %v421 = vld [vmem:[%s4 + $0x50] sm:$0xff]
  %v422 = vld [vmem:[%s4 + $0x58] sm:$0xff]
  %v423 = vld [vmem:[%s4 + $0x60] sm:$0xff]
  %v424 = vld [vmem:[%s4 + $0x68] sm:$0xff]
  %v425 = vld [vmem:[%s4 + $0x70] sm:$0xff]
  %v426 = vld [vmem:[%s4 + $0x78] sm:$0xff]
  %v427 = vrsqrt.pop %v395
  %v428 = vmul.f32 %v427, %v395
  %v429 = vmul.f32 %v428, %v427
  %v430 = vmul.f32 0.5, %v429
  %v431 = vsub.f32 1.5, %v430
  %v432 = vmul.f32 %v427, %v431
  %v433 = vmul.f32 %v395, %v432
  %vm434 = vcmp.eq.f32.partialorder %v395, inf
  %v435 = vsel %vm434, %v395, %v433
  %vm436 = vcmp.eq.f32.partialorder %v395, 0.0
  %v437 = vand.u32 %v395, 2147483648
  %v438 = vsel %vm436, %v437, %v435
  %v439 = vrsqrt.pop %v396
  %v440 = vmul.f32 %v439, %v396
  %v441 = vmul.f32 %v440, %v439
  %v442 = vmul.f32 0.5, %v441
  %v443 = vsub.f32 1.5, %v442
  %v444 = vmul.f32 %v439, %v443
  %v445 = vmul.f32 %v396, %v444
  %vm446 = vcmp.eq.f32.partialorder %v396, inf
  %v447 = vsel %vm446, %v396, %v445
  %vm448 = vcmp.eq.f32.partialorder %v396, 0.0
  %v449 = vand.u32 %v396, 2147483648
  %v450 = vsel %vm448, %v449, %v447
  %v451 = vrsqrt.pop %v397
  %v452 = vmul.f32 %v451, %v397
  %v453 = vmul.f32 %v452, %v451
  %v454 = vmul.f32 0.5, %v453
  %v455 = vsub.f32 1.5, %v454
  %v456 = vmul.f32 %v451, %v455
  %v457 = vmul.f32 %v397, %v456
  %vm458 = vcmp.eq.f32.partialorder %v397, inf
  %v459 = vsel %vm458, %v397, %v457
  %vm460 = vcmp.eq.f32.partialorder %v397, 0.0
  %v461 = vand.u32 %v397, 2147483648
  %v462 = vsel %vm460, %v461, %v459
  %v463 = vrsqrt.pop %v398
  %v464 = vmul.f32 %v463, %v398
  %v465 = vmul.f32 %v464, %v463
  %v466 = vmul.f32 0.5, %v465
  %v467 = vsub.f32 1.5, %v466
  %v468 = vmul.f32 %v463, %v467
  %v469 = vmul.f32 %v398, %v468
  %vm470 = vcmp.eq.f32.partialorder %v398, inf
  %v471 = vsel %vm470, %v398, %v469
  %vm472 = vcmp.eq.f32.partialorder %v398, 0.0
  %v473 = vand.u32 %v398, 2147483648
  %v474 = vsel %vm472, %v473, %v471
  %v475 = vrsqrt.pop %v399
  %v476 = vmul.f32 %v475, %v399
  %v477 = vmul.f32 %v476, %v475
  %v478 = vmul.f32 0.5, %v477
  %v479 = vsub.f32 1.5, %v478
  %v480 = vmul.f32 %v475, %v479
  %v481 = vmul.f32 %v399, %v480
  %vm482 = vcmp.eq.f32.partialorder %v399, inf
  %v483 = vsel %vm482, %v399, %v481
  %vm484 = vcmp.eq.f32.partialorder %v399, 0.0
  %v485 = vand.u32 %v399, 2147483648
  %v486 = vsel %vm484, %v485, %v483
  %v487 = vrsqrt.pop %v400
  %v488 = vmul.f32 %v487, %v400
  %v489 = vmul.f32 %v488, %v487
  %v490 = vmul.f32 0.5, %v489
  %v491 = vsub.f32 1.5, %v490
  %v492 = vmul.f32 %v487, %v491
  %v493 = vmul.f32 %v400, %v492
  %vm494 = vcmp.eq.f32.partialorder %v400, inf
  %v495 = vsel %vm494, %v400, %v493
  %vm496 = vcmp.eq.f32.partialorder %v400, 0.0
  %v497 = vand.u32 %v400, 2147483648
  %v498 = vsel %vm496, %v497, %v495
  %v499 = vrsqrt.pop %v401
  %v500 = vmul.f32 %v499, %v401
  %v501 = vmul.f32 %v500, %v499
  %v502 = vmul.f32 0.5, %v501
  %v503 = vsub.f32 1.5, %v502
  %v504 = vmul.f32 %v499, %v503
  %v505 = vmul.f32 %v401, %v504
  %vm506 = vcmp.eq.f32.partialorder %v401, inf
  %v507 = vsel %vm506, %v401, %v505
  %vm508 = vcmp.eq.f32.partialorder %v401, 0.0
  %v509 = vand.u32 %v401, 2147483648
  %v510 = vsel %vm508, %v509, %v507
  %v511 = vrsqrt.pop %v402
  %v512 = vmul.f32 %v511, %v402
  %v513 = vmul.f32 %v512, %v511
  %v514 = vmul.f32 0.5, %v513
  %v515 = vsub.f32 1.5, %v514
  %v516 = vmul.f32 %v511, %v515
  %v517 = vmul.f32 %v402, %v516
  %vm518 = vcmp.eq.f32.partialorder %v402, inf
  %v519 = vsel %vm518, %v402, %v517
  %vm520 = vcmp.eq.f32.partialorder %v402, 0.0
  %v521 = vand.u32 %v402, 2147483648
  %v522 = vsel %vm520, %v521, %v519
  %v523 = vrsqrt.pop %v403
  %v524 = vmul.f32 %v523, %v403
  %v525 = vmul.f32 %v524, %v523
  %v526 = vmul.f32 0.5, %v525
  %v527 = vsub.f32 1.5, %v526
  %v528 = vmul.f32 %v523, %v527
  %v529 = vmul.f32 %v403, %v528
  %vm530 = vcmp.eq.f32.partialorder %v403, inf
  %v531 = vsel %vm530, %v403, %v529
  %vm532 = vcmp.eq.f32.partialorder %v403, 0.0
  %v533 = vand.u32 %v403, 2147483648
  %v534 = vsel %vm532, %v533, %v531
  %v535 = vrsqrt.pop %v404
  %v536 = vmul.f32 %v535, %v404
  %v537 = vmul.f32 %v536, %v535
  %v538 = vmul.f32 0.5, %v537
  %v539 = vsub.f32 1.5, %v538
  %v540 = vmul.f32 %v535, %v539
  %v541 = vmul.f32 %v404, %v540
  %vm542 = vcmp.eq.f32.partialorder %v404, inf
  %v543 = vsel %vm542, %v404, %v541
  %vm544 = vcmp.eq.f32.partialorder %v404, 0.0
  %v545 = vand.u32 %v404, 2147483648
  %v546 = vsel %vm544, %v545, %v543
  %v547 = vrsqrt.pop %v405
  %v548 = vmul.f32 %v547, %v405
  %v549 = vmul.f32 %v548, %v547
  %v550 = vmul.f32 0.5, %v549
  %v551 = vsub.f32 1.5, %v550
  %v552 = vmul.f32 %v547, %v551
  %v553 = vmul.f32 %v405, %v552
  %vm554 = vcmp.eq.f32.partialorder %v405, inf
  %v555 = vsel %vm554, %v405, %v553
  %vm556 = vcmp.eq.f32.partialorder %v405, 0.0
  %v557 = vand.u32 %v405, 2147483648
  %v558 = vsel %vm556, %v557, %v555
  %v559 = vrsqrt.pop %v406
  %v560 = vmul.f32 %v559, %v406
  %v561 = vmul.f32 %v560, %v559
  %v562 = vmul.f32 0.5, %v561
  %v563 = vsub.f32 1.5, %v562
  %v564 = vmul.f32 %v559, %v563
  %v565 = vmul.f32 %v406, %v564
  %vm566 = vcmp.eq.f32.partialorder %v406, inf
  %v567 = vsel %vm566, %v406, %v565
  %vm568 = vcmp.eq.f32.partialorder %v406, 0.0
  %v569 = vand.u32 %v406, 2147483648
  %v570 = vsel %vm568, %v569, %v567
  %v571 = vrsqrt.pop %v407
  %v572 = vmul.f32 %v571, %v407
  %v573 = vmul.f32 %v572, %v571
  %v574 = vmul.f32 0.5, %v573
  %v575 = vsub.f32 1.5, %v574
  %v576 = vmul.f32 %v571, %v575
  %v577 = vmul.f32 %v407, %v576
  %vm578 = vcmp.eq.f32.partialorder %v407, inf
  %v579 = vsel %vm578, %v407, %v577
  %vm580 = vcmp.eq.f32.partialorder %v407, 0.0
  %v581 = vand.u32 %v407, 2147483648
  %v582 = vsel %vm580, %v581, %v579
  %v583 = vrsqrt.pop %v408
  %v584 = vmul.f32 %v583, %v408
  %v585 = vmul.f32 %v584, %v583
  %v586 = vmul.f32 0.5, %v585
  %v587 = vsub.f32 1.5, %v586
  %v588 = vmul.f32 %v583, %v587
  %v589 = vmul.f32 %v408, %v588
  %vm590 = vcmp.eq.f32.partialorder %v408, inf
  %v591 = vsel %vm590, %v408, %v589
  %vm592 = vcmp.eq.f32.partialorder %v408, 0.0
  %v593 = vand.u32 %v408, 2147483648
  %v594 = vsel %vm592, %v593, %v591
  %v595 = vrsqrt.pop %v409
  %v596 = vmul.f32 %v595, %v409
  %v597 = vmul.f32 %v596, %v595
  %v598 = vmul.f32 0.5, %v597
  %v599 = vsub.f32 1.5, %v598
  %v600 = vmul.f32 %v595, %v599
  %v601 = vmul.f32 %v409, %v600
  %vm602 = vcmp.eq.f32.partialorder %v409, inf
  %v603 = vsel %vm602, %v409, %v601
  %vm604 = vcmp.eq.f32.partialorder %v409, 0.0
  %v605 = vand.u32 %v409, 2147483648
  %v606 = vsel %vm604, %v605, %v603
  %v607 = vrsqrt.pop %v410
  %v608 = vmul.f32 %v607, %v410
  %v609 = vmul.f32 %v608, %v607
  %v610 = vmul.f32 0.5, %v609
  %v611 = vsub.f32 1.5, %v610
  %v612 = vmul.f32 %v607, %v611
  %v613 = vmul.f32 %v410, %v612
  %vm614 = vcmp.eq.f32.partialorder %v410, inf
  %v615 = vsel %vm614, %v410, %v613
  %vm616 = vcmp.eq.f32.partialorder %v410, 0.0
  %v617 = vand.u32 %v410, 2147483648
  %v618 = vsel %vm616, %v617, %v615
  %v619 = vmul.f32 %v411, %v438
  %v620 = vmul.f32 %v412, %v450
  %v621 = vmul.f32 %v413, %v462
  %v622 = vmul.f32 %v414, %v474
  %v623 = vmul.f32 %v415, %v486
  %v624 = vmul.f32 %v416, %v498
  %v625 = vmul.f32 %v417, %v510
  %v626 = vmul.f32 %v418, %v522
  %v627 = vmul.f32 %v419, %v534
  %v628 = vmul.f32 %v420, %v546
  %v629 = vmul.f32 %v421, %v558
  %v630 = vmul.f32 %v422, %v570
  %v631 = vmul.f32 %v423, %v582
  %v632 = vmul.f32 %v424, %v594
  %v633 = vmul.f32 %v425, %v606
  %v634 = vmul.f32 %v426, %v618
  %v635 = vadd.f32 %v298, %v619
  %v636 = vadd.f32 %v299, %v620
  %v637 = vadd.f32 %v300, %v621
  %v638 = vadd.f32 %v301, %v622
  %v639 = vadd.f32 %v302, %v623
  %v640 = vadd.f32 %v303, %v624
  %v641 = vadd.f32 %v304, %v625
  %v642 = vadd.f32 %v305, %v626
  %v643 = vadd.f32 %v306, %v627
  %v644 = vadd.f32 %v307, %v628
  %v645 = vadd.f32 %v308, %v629
  %v646 = vadd.f32 %v309, %v630
  %v647 = vadd.f32 %v310, %v631
  %v648 = vadd.f32 %v311, %v632
  %v649 = vadd.f32 %v312, %v633
  %v650 = vadd.f32 %v313, %v634
  %651 = vmatpush.xpose.msra.mxu0 %v650
  %652 = vmatpush.xpose.msra.mxu0 %v649
  %653 = vmatpush.xpose.msra.mxu0 %v648
  %654 = vmatpush.xpose.msra.mxu0 %v647
  %655 = vmatpush.xpose.msra.mxu0 %v646
  %656 = vmatpush.xpose.msra.mxu0 %v645
  %657 = vmatpush.xpose.msra.mxu0 %v644
  %658 = vmatpush.xpose.msra.mxu0 %v643
  %659 = vmatpush.xpose.msra.mxu0 %v642
  %660 = vmatpush.xpose.msra.mxu0 %v641
  %661 = vmatpush.xpose.msra.mxu0 %v640
  %662 = vmatpush.xpose.msra.mxu0 %v639
  %663 = vmatpush.xpose.msra.mxu0 %v638
  %664 = vmatpush.xpose.msra.mxu0 %v637
  %665 = vmatpush.xpose.msra.mxu0 %v636
  %666 = vmatpush.xpose.msra.mxu0 %v635
  %667 = vmatmul.f32.gmra.mxu0 %v635
  %v668 = vpop.f32.mrf.mxu0
  %v669 = vadd.f32 0.0, %v668
  %670 = vmatmul.f32.gmra.mxu0 %v636
  %v671 = vpop.f32.mrf.mxu0
  %v672 = vadd.f32 0.0, %v671
  %673 = vmatmul.f32.gmra.mxu0 %v637
  %v674 = vpop.f32.mrf.mxu0
  %v675 = vadd.f32 0.0, %v674
  %676 = vmatmul.f32.gmra.mxu0 %v638
  %v677 = vpop.f32.mrf.mxu0
  %v678 = vadd.f32 0.0, %v677
  %679 = vmatmul.f32.gmra.mxu0 %v639
  %v680 = vpop.f32.mrf.mxu0
  %v681 = vadd.f32 0.0, %v680
  %682 = vmatmul.f32.gmra.mxu0 %v640
  %v683 = vpop.f32.mrf.mxu0
  %v684 = vadd.f32 0.0, %v683
  %685 = vmatmul.f32.gmra.mxu0 %v641
  %v686 = vpop.f32.mrf.mxu0
  %v687 = vadd.f32 0.0, %v686
  %688 = vmatmul.f32.gmra.mxu0 %v642
  %v689 = vpop.f32.mrf.mxu0
  %v690 = vadd.f32 0.0, %v689
  %691 = vmatmul.f32.gmra.mxu0 %v643
  %v692 = vpop.f32.mrf.mxu0
  %v693 = vadd.f32 0.0, %v692
  %694 = vmatmul.f32.gmra.mxu0 %v644
  %v695 = vpop.f32.mrf.mxu0
  %v696 = vadd.f32 0.0, %v695
  %697 = vmatmul.f32.gmra.mxu0 %v645
  %v698 = vpop.f32.mrf.mxu0
  %v699 = vadd.f32 0.0, %v698
  %700 = vmatmul.f32.gmra.mxu0 %v646
  %v701 = vpop.f32.mrf.mxu0
  %v702 = vadd.f32 0.0, %v701
  %703 = vmatmul.f32.gmra.mxu0 %v647
  %v704 = vpop.f32.mrf.mxu0
  %v705 = vadd.f32 0.0, %v704
  %706 = vmatmul.f32.gmra.mxu0 %v648
  %v707 = vpop.f32.mrf.mxu0
  %v708 = vadd.f32 0.0, %v707
  %709 = vmatmul.f32.gmra.mxu0 %v649
  %v710 = vpop.f32.mrf.mxu0
  %v711 = vadd.f32 0.0, %v710
  %712 = vmatmul.f32.gmra.mxu0 %v650
  %v713 = vpop.f32.mrf.mxu0
  %v714 = vadd.f32 0.0, %v713
  %715 = vdwg.mxu0
  %716 = vst [vmem:[%s5] sm:$0xff] %v669
  %717 = vst [vmem:[%s5 + $0x8] sm:$0xff] %v672
  %718 = vst [vmem:[%s5 + $0x10] sm:$0xff] %v675
  %719 = vst [vmem:[%s5 + $0x18] sm:$0xff] %v678
  %720 = vst [vmem:[%s5 + $0x20] sm:$0xff] %v681
  %721 = vst [vmem:[%s5 + $0x28] sm:$0xff] %v684
  %722 = vst [vmem:[%s5 + $0x30] sm:$0xff] %v687
  %723 = vst [vmem:[%s5 + $0x38] sm:$0xff] %v690
  %724 = vst [vmem:[%s5 + $0x40] sm:$0xff] %v693
  %725 = vst [vmem:[%s5 + $0x48] sm:$0xff] %v696
  %726 = vst [vmem:[%s5 + $0x50] sm:$0xff] %v699
  %727 = vst [vmem:[%s5 + $0x58] sm:$0xff] %v702
  %728 = vst [vmem:[%s5 + $0x60] sm:$0xff] %v705
  %729 = vst [vmem:[%s5 + $0x68] sm:$0xff] %v708
  %730 = vst [vmem:[%s5 + $0x70] sm:$0xff] %v711
  %731 = vst [vmem:[%s5 + $0x78] sm:$0xff] %v714
  // Predicated region
  $region22: #{_forward_impl.1} parent=0 // pred_check
    _
  $region23: #{_forward_impl.1} parent=0 // pred_check_branch
    %733 = sbr.rel (0) target = $region25
  $region24: #{_forward_impl.1} parent=0 // pred_region
    _
  $region25: #{_forward_impl.1} parent=0 // pred_fallthru
    _
  // Predicated region
  $region26: #{_forward_impl.1} parent=0 // pred_check
    _
  $region27: #{_forward_impl.1} parent=0 // pred_check_branch
    %735 = sbr.rel (0) target = $region29
  $region28: #{_forward_impl.1} parent=0 // pred_region
    _
  $region29: #{_forward_impl.1} parent=0 // pred_fallthru
    _

</llo_original>
